<compile_context>
chip_gen: v5e
topology: v5e:2x2
jax: 0.10.0
libtpu: 0.0.40
codegen_flags: <defaults>
</compile_context>

<pallas_src>
import functools

import numpy as np
import jax
import jax.numpy as jnp
from jax.experimental import pallas as pl
from jax.experimental.pallas import tpu as pltpu


# ----------------------------------------------------------------------------
# Fused kernel: 1x1 expand -> dw3x3 -> folded (1x1 project + 1x1 final), per image.
# Layout inside the kernel: channels on sublanes, flattened H*W on lanes.
# ----------------------------------------------------------------------------
def _fused_spnas_kernel(x_ref, w1_ref, b1_ref, wdw_ref, bdw_ref, mask_ref,
                        w23t_ref, b23_ref, o_ref, *, W):
    Cin = x_ref.shape[1]
    P = x_ref.shape[2]

    x = x_ref[0]                                      # (Cin, P) f32

    # ---- 1x1 expand conv + BN + ReLU: K=Cin is tiny -> VPU broadcast-FMAs ----
    t = w1_ref[0] * x[0:1, :]                         # (M,1)*(1,P) -> (M,P)
    for c in range(1, Cin):
        t = t + w1_ref[c] * x[c:c + 1, :]
    t = jnp.maximum(t + b1_ref[...], 0.0)             # (M, P) f32

    # ---- depthwise 3x3, stride 1, pad 1 + BN + ReLU --------------------------
    # Neighbour taps are circular lane rotations (XLU); contributions whose
    # source pixel falls outside the image are zeroed by precomputed masks
    # (this reproduces zero padding exactly).
    acc = t * wdw_ref[4]                              # centre tap, (M,1) bcast
    for dy in (-1, 0, 1):
        for dx in (-1, 0, 1):
            if dy == 0 and dx == 0:
                continue
            k = (dy + 1) * 3 + (dx + 1)
            off = dy * W + dx
            # shifted[:, p] = t[:, (p + off) % P]
            shifted = pltpu.roll(t, (-off) % P, 1)
            acc = acc + (shifted * mask_ref[k]) * wdw_ref[k]
    acc = jnp.maximum(acc + bdw_ref[...], 0.0)        # (M, P) f32

    # ---- folded: (1x1 project + BN, no act) then (1x1 final + BN + ReLU) -----
    # Exact fold w23 = w2 @ w3; kept in f32 (K=24 MXU cost is negligible).
    y = jnp.dot(w23t_ref[...], acc, preferred_element_type=jnp.float32)
    y = jnp.maximum(y + b23_ref[...], 0.0)            # (Cout, P) f32
    o_ref[0] = y.astype(o_ref.dtype)                  # single cast at the store


# ----------------------------------------------------------------------------
# Boundary masks for the 9 taps (constant, depends only on H, W).
# ----------------------------------------------------------------------------
def _tap_masks(H, W):
    hh = np.arange(H)[:, None]
    ww = np.arange(W)[None, :]
    ms = []
    for dy in (-1, 0, 1):
        for dx in (-1, 0, 1):
            ok = (hh + dy >= 0) & (hh + dy < H) & (ww + dx >= 0) & (ww + dx < W)
            ms.append(ok.reshape(1, H * W))
    return jnp.asarray(np.stack(ms, axis=0).astype(np.float32))   # (9, 1, P)


# ----------------------------------------------------------------------------
# Wrapper: NCHW in / NCHW out (bf16), one pallas_call, grid over batch.
# ----------------------------------------------------------------------------
def spnas_final_block(x_nchw, params, *, out_dtype=jnp.bfloat16):
    N, Cin, H, W = x_nchw.shape
    P = H * W
    M = params["b1"].shape[0]
    Cout = params["w23t"].shape[0]

    x = x_nchw.reshape(N, Cin, P).astype(jnp.float32)   # flattened NCHW, no transpose
    masks = _tap_masks(H, W)                             # (9, 1, P) constant

    # One image per grid step: for N=2 this is one step per v7x TensorCore.
    # TODO(synk): for N == 1 (or very large N on single-TC v5e/v6e) tile several
    # images / row-bands per step to keep both v7x cores busy and amortize the
    # ~0.35 us per-grid-step overhead.
    out = pl.pallas_call(
        functools.partial(_fused_spnas_kernel, W=W),
        out_shape=jax.ShapeDtypeStruct((N, Cout, P), out_dtype),
        grid=(N,),
        in_specs=[
            pl.BlockSpec((1, Cin, P), lambda n: (n, 0, 0)),      # per-image slab
            pl.BlockSpec((Cin, M, 1), lambda n: (0, 0, 0)),      # weights: VMEM-resident
            pl.BlockSpec((M, 1), lambda n: (0, 0)),
            pl.BlockSpec((9, M, 1), lambda n: (0, 0, 0)),
            pl.BlockSpec((M, 1), lambda n: (0, 0)),
            pl.BlockSpec((9, 1, P), lambda n: (0, 0, 0)),        # boundary masks
            pl.BlockSpec((Cout, M), lambda n: (0, 0)),
            pl.BlockSpec((Cout, 1), lambda n: (0, 0)),
        ],
        out_specs=pl.BlockSpec((1, Cout, P), lambda n: (n, 0, 0)),  # lane-dense (P=256)
        compiler_params=pltpu.CompilerParams(
            dimension_semantics=("parallel",)),
    )(x, params["w1"], params["b1"], params["wdw"], params["bdw"],
      masks, params["w23t"], params["b23"])

    return out.reshape(N, Cout, H, W)                    # already channel-major: reshape only


# ----------------------------------------------------------------------------
# Parameter construction (deterministic).  BatchNorm in inference mode is
# folded into a per-output-channel scale on the conv weight plus a bias.
# The projection conv (no activation) and the final 1x1 conv are folded into
# one matmul (exact).  All weights stored f32, channel-on-sublane layout.
# ----------------------------------------------------------------------------
def _bn_scale_bias(kg, kb, km, kv, C, eps=1e-5):
    gamma = 1.0 + 0.1 * jax.random.normal(kg, (C,), jnp.float32)
    beta = 0.1 * jax.random.normal(kb, (C,), jnp.float32)
    mean = 0.1 * jax.random.normal(km, (C,), jnp.float32)
    var = jnp.abs(jax.random.normal(kv, (C,), jnp.float32)) + 0.5
    scale = gamma / jnp.sqrt(var + eps)
    bias = beta - mean * scale
    return scale, bias


def init_params(key, in_channels, mid_channels, out_channels):
    M = 6 * in_channels  # exp_factor = 6
    ks = jax.random.split(key, 20)

    # exp_conv: 1x1, in -> M
    w1 = 0.1 * jax.random.normal(ks[0], (in_channels, M), jnp.float32)
    s1, b1 = _bn_scale_bias(ks[1], ks[2], ks[3], ks[4], M)
    w1 = w1 * s1[None, :]

    # depthwise 3x3 on M channels; tap index k = (dy+1)*3 + (dx+1)
    wdw = 0.1 * jax.random.normal(ks[5], (3, 3, M), jnp.float32)
    sdw, bdw = _bn_scale_bias(ks[6], ks[7], ks[8], ks[9], M)
    wdw = (wdw * sdw.reshape(1, 1, M)).reshape(9, M)

    # unit conv2: 1x1, M -> mid, no activation
    w2 = 0.1 * jax.random.normal(ks[10], (M, mid_channels), jnp.float32)
    s2, b2 = _bn_scale_bias(ks[11], ks[12], ks[13], ks[14], mid_channels)
    w2 = w2 * s2[None, :]

    # final conv: 1x1, mid -> out, ReLU
    w3 = 0.1 * jax.random.normal(ks[15], (mid_channels, out_channels), jnp.float32)
    s3, b3 = _bn_scale_bias(ks[16], ks[17], ks[18], ks[19], out_channels)
    w3 = w3 * s3[None, :]

    # Exact fold: relu((a@w2+b2)@w3+b3) == relu(a@(w2@w3) + (b2@w3+b3))
    w23 = w2 @ w3                       # (M, Cout)
    b23 = b2 @ w3 + b3                  # (Cout,)

    return dict(
        w1=w1.reshape(in_channels, M, 1).astype(jnp.float32),
        b1=b1.reshape(M, 1).astype(jnp.float32),
        wdw=wdw.reshape(9, M, 1).astype(jnp.float32),
        bdw=bdw.reshape(M, 1).astype(jnp.float32),
        w23t=w23.T.astype(jnp.float32),            # (Cout, M), f32 per review
        b23=b23.reshape(out_channels, 1).astype(jnp.float32),
    )


# ----------------------------------------------------------------------------
# Pure-JAX reference (same folded params, f32 math) for the sanity check.
# ----------------------------------------------------------------------------
def _reference(x_nchw, params):
    N, Cin, H, W = x_nchw.shape
    hp = jax.lax.Precision.HIGHEST
    x = x_nchw.astype(jnp.float32)
    w1 = params["w1"][:, :, 0]                                 # (Cin, M)
    t = jnp.einsum("nchw,cm->nmhw", x, w1, precision=hp)
    t = jnp.maximum(t + params["b1"][:, 0][None, :, None, None], 0.0)
    tp = jnp.pad(t, ((0, 0), (0, 0), (1, 1), (1, 1)))
    wdw = params["wdw"][:, :, 0].reshape(3, 3, -1)             # (3, 3, M)
    acc = jnp.zeros_like(t)
    for ky in range(3):
        for kx in range(3):
            acc = acc + tp[:, :, ky:ky + H, kx:kx + W] * wdw[ky, kx][None, :, None, None]
    acc = jnp.maximum(acc + params["bdw"][:, 0][None, :, None, None], 0.0)
    y = jnp.einsum("om,nmhw->nohw", params["w23t"], acc, precision=hp)
    return jnp.maximum(y + params["b23"][:, 0][None, :, None, None], 0.0)


# ----------------------------------------------------------------------------
if __name__ == "__main__":
    N, Cin, H, W = 2, 4, 16, 16
    Cmid, Cout = 8, 16

    key = jax.random.PRNGKey(0)
    kx, kp = jax.random.split(key)
    x = jax.random.normal(kx, (N, Cin, H, W), jnp.float32)
    params = init_params(kp, Cin, Cmid, Cout)

    y = jax.jit(spnas_final_block)(x, params)
    y = jax.block_until_ready(y)

    assert y.shape == (N, Cout, H, W), y.shape
    y32 = y.astype(jnp.float32)
    assert bool(jnp.all(jnp.isfinite(y32)))

    y_ref = _reference(x, params)
    # bf16 output storage + MXU default precision vs f32 reference -> loose tol.
    assert bool(jnp.allclose(y32, y_ref, rtol=3e-2, atol=3e-2)), \
        float(jnp.max(jnp.abs(y32 - y_ref)))

    print("KERNEL_OK")
</pallas_src>

<mosaic_0001>
module attributes {stable_mosaic.version = 11 : i64} {
  func.func @_fused_spnas_kernel(%arg0: i32, %arg1: memref<1x4x256xf32, #tpu.memory_space<vmem>>, %arg2: memref<4x24x1xf32, #tpu.memory_space<vmem>>, %arg3: memref<24x1xf32, #tpu.memory_space<vmem>>, %arg4: memref<9x24x1xf32, #tpu.memory_space<vmem>>, %arg5: memref<24x1xf32, #tpu.memory_space<vmem>>, %arg6: memref<9x1x256xf32, #tpu.memory_space<vmem>>, %arg7: memref<16x24xf32, #tpu.memory_space<vmem>>, %arg8: memref<16x1xf32, #tpu.memory_space<vmem>>, %arg9: memref<1x16x256xbf16, #tpu.memory_space<vmem>>) attributes {dimension_semantics = [#tpu.dimension_semantics<parallel>], iteration_bounds = array<i64: 2>, scalar_prefetch = 0 : i64, scratch_operands = 0 : i64, tpu.core_type = #tpu.core_type<tc>, window_params = [{transform_indices = @transform_0, window_bounds = array<i64: 1, 4, 256>}, {pipeline_mode = #tpu.pipeline_mode<synchronous>, transform_indices = @transform_1, window_bounds = array<i64: 4, 24, 1>}, {pipeline_mode = #tpu.pipeline_mode<synchronous>, transform_indices = @transform_2, window_bounds = array<i64: 24, 1>}, {pipeline_mode = #tpu.pipeline_mode<synchronous>, transform_indices = @transform_3, window_bounds = array<i64: 9, 24, 1>}, {pipeline_mode = #tpu.pipeline_mode<synchronous>, transform_indices = @transform_4, window_bounds = array<i64: 24, 1>}, {pipeline_mode = #tpu.pipeline_mode<synchronous>, transform_indices = @transform_5, window_bounds = array<i64: 9, 1, 256>}, {pipeline_mode = #tpu.pipeline_mode<synchronous>, transform_indices = @transform_6, window_bounds = array<i64: 16, 24>}, {pipeline_mode = #tpu.pipeline_mode<synchronous>, transform_indices = @transform_7, window_bounds = array<i64: 16, 1>}, {transform_indices = @transform_8, window_bounds = array<i64: 1, 16, 256>}]} {
    %c0 = arith.constant 0 : index
    %c0_0 = arith.constant 0 : index
    %c0_1 = arith.constant 0 : index
    %0 = vector.load %arg1[%c0, %c0_0, %c0_1] : memref<1x4x256xf32, #tpu.memory_space<vmem>>, vector<1x4x256xf32>
    %1 = vector.shape_cast %0 : vector<1x4x256xf32> to vector<4x256xf32>
    %c0_2 = arith.constant 0 : index
    %c0_3 = arith.constant 0 : index
    %c0_4 = arith.constant 0 : index
    %2 = vector.load %arg2[%c0_2, %c0_3, %c0_4] : memref<4x24x1xf32, #tpu.memory_space<vmem>>, vector<1x24x1xf32>
    %3 = vector.shape_cast %2 : vector<1x24x1xf32> to vector<24x1xf32>
    %4 = vector.extract_strided_slice %1 {offsets = [0, 0], sizes = [1, 256], strides = [1, 1]} : vector<4x256xf32> to vector<1x256xf32>
    %5 = vector.broadcast %3 : vector<24x1xf32> to vector<24x256xf32>
    %6 = vector.broadcast %4 : vector<1x256xf32> to vector<24x256xf32>
    %7 = arith.mulf %5, %6 : vector<24x256xf32>
    %c1 = arith.constant 1 : index
    %c0_5 = arith.constant 0 : index
    %c0_6 = arith.constant 0 : index
    %8 = vector.load %arg2[%c1, %c0_5, %c0_6] : memref<4x24x1xf32, #tpu.memory_space<vmem>>, vector<1x24x1xf32>
    %9 = vector.shape_cast %8 : vector<1x24x1xf32> to vector<24x1xf32>
    %10 = vector.extract_strided_slice %1 {offsets = [1, 0], sizes = [1, 256], strides = [1, 1]} : vector<4x256xf32> to vector<1x256xf32>
    %11 = vector.broadcast %9 : vector<24x1xf32> to vector<24x256xf32>
    %12 = vector.broadcast %10 : vector<1x256xf32> to vector<24x256xf32>
    %13 = arith.mulf %11, %12 : vector<24x256xf32>
    %14 = arith.addf %7, %13 : vector<24x256xf32>
    %c2 = arith.constant 2 : index
    %c0_7 = arith.constant 0 : index
    %c0_8 = arith.constant 0 : index
    %15 = vector.load %arg2[%c2, %c0_7, %c0_8] : memref<4x24x1xf32, #tpu.memory_space<vmem>>, vector<1x24x1xf32>
    %16 = vector.shape_cast %15 : vector<1x24x1xf32> to vector<24x1xf32>
    %17 = vector.extract_strided_slice %1 {offsets = [2, 0], sizes = [1, 256], strides = [1, 1]} : vector<4x256xf32> to vector<1x256xf32>
    %18 = vector.broadcast %16 : vector<24x1xf32> to vector<24x256xf32>
    %19 = vector.broadcast %17 : vector<1x256xf32> to vector<24x256xf32>
    %20 = arith.mulf %18, %19 : vector<24x256xf32>
    %21 = arith.addf %14, %20 : vector<24x256xf32>
    %c3 = arith.constant 3 : index
    %c0_9 = arith.constant 0 : index
    %c0_10 = arith.constant 0 : index
    %22 = vector.load %arg2[%c3, %c0_9, %c0_10] : memref<4x24x1xf32, #tpu.memory_space<vmem>>, vector<1x24x1xf32>
    %23 = vector.shape_cast %22 : vector<1x24x1xf32> to vector<24x1xf32>
    %24 = vector.extract_strided_slice %1 {offsets = [3, 0], sizes = [1, 256], strides = [1, 1]} : vector<4x256xf32> to vector<1x256xf32>
    %25 = vector.broadcast %23 : vector<24x1xf32> to vector<24x256xf32>
    %26 = vector.broadcast %24 : vector<1x256xf32> to vector<24x256xf32>
    %27 = arith.mulf %25, %26 : vector<24x256xf32>
    %28 = arith.addf %21, %27 : vector<24x256xf32>
    %c0_11 = arith.constant 0 : index
    %c0_12 = arith.constant 0 : index
    %29 = vector.load %arg3[%c0_11, %c0_12] : memref<24x1xf32, #tpu.memory_space<vmem>>, vector<24x1xf32>
    %30 = vector.broadcast %29 : vector<24x1xf32> to vector<24x256xf32>
    %31 = arith.addf %28, %30 : vector<24x256xf32>
    %cst = arith.constant 0.000000e+00 : f32
    %32 = vector.broadcast %cst : f32 to vector<24x256xf32>
    %33 = arith.maximumf %31, %32 : vector<24x256xf32>
    %c4 = arith.constant 4 : index
    %c0_13 = arith.constant 0 : index
    %c0_14 = arith.constant 0 : index
    %34 = vector.load %arg4[%c4, %c0_13, %c0_14] : memref<9x24x1xf32, #tpu.memory_space<vmem>>, vector<1x24x1xf32>
    %35 = vector.shape_cast %34 : vector<1x24x1xf32> to vector<24x1xf32>
    %36 = vector.broadcast %35 : vector<24x1xf32> to vector<24x256xf32>
    %37 = arith.mulf %33, %36 : vector<24x256xf32>
    %c17_i32 = arith.constant 17 : i32
    %38 = tpu.dynamic_rotate %33 by %c17_i32 dim 1 : vector<24x256xf32>, i32 -> vector<24x256xf32>
    %c0_15 = arith.constant 0 : index
    %c0_16 = arith.constant 0 : index
    %c0_17 = arith.constant 0 : index
    %39 = vector.load %arg6[%c0_15, %c0_16, %c0_17] : memref<9x1x256xf32, #tpu.memory_space<vmem>>, vector<1x1x256xf32>
    %40 = vector.shape_cast %39 : vector<1x1x256xf32> to vector<1x256xf32>
    %41 = vector.broadcast %40 : vector<1x256xf32> to vector<24x256xf32>
    %42 = arith.mulf %38, %41 : vector<24x256xf32>
    %c0_18 = arith.constant 0 : index
    %c0_19 = arith.constant 0 : index
    %c0_20 = arith.constant 0 : index
    %43 = vector.load %arg4[%c0_18, %c0_19, %c0_20] : memref<9x24x1xf32, #tpu.memory_space<vmem>>, vector<1x24x1xf32>
    %44 = vector.shape_cast %43 : vector<1x24x1xf32> to vector<24x1xf32>
    %45 = vector.broadcast %44 : vector<24x1xf32> to vector<24x256xf32>
    %46 = arith.mulf %42, %45 : vector<24x256xf32>
    %47 = arith.addf %37, %46 : vector<24x256xf32>
    %c16_i32 = arith.constant 16 : i32
    %48 = tpu.dynamic_rotate %33 by %c16_i32 dim 1 : vector<24x256xf32>, i32 -> vector<24x256xf32>
    %c1_21 = arith.constant 1 : index
    %c0_22 = arith.constant 0 : index
    %c0_23 = arith.constant 0 : index
    %49 = vector.load %arg6[%c1_21, %c0_22, %c0_23] : memref<9x1x256xf32, #tpu.memory_space<vmem>>, vector<1x1x256xf32>
    %50 = vector.shape_cast %49 : vector<1x1x256xf32> to vector<1x256xf32>
    %51 = vector.broadcast %50 : vector<1x256xf32> to vector<24x256xf32>
    %52 = arith.mulf %48, %51 : vector<24x256xf32>
    %c1_24 = arith.constant 1 : index
    %c0_25 = arith.constant 0 : index
    %c0_26 = arith.constant 0 : index
    %53 = vector.load %arg4[%c1_24, %c0_25, %c0_26] : memref<9x24x1xf32, #tpu.memory_space<vmem>>, vector<1x24x1xf32>
    %54 = vector.shape_cast %53 : vector<1x24x1xf32> to vector<24x1xf32>
    %55 = vector.broadcast %54 : vector<24x1xf32> to vector<24x256xf32>
    %56 = arith.mulf %52, %55 : vector<24x256xf32>
    %57 = arith.addf %47, %56 : vector<24x256xf32>
    %c15_i32 = arith.constant 15 : i32
    %58 = tpu.dynamic_rotate %33 by %c15_i32 dim 1 : vector<24x256xf32>, i32 -> vector<24x256xf32>
    %c2_27 = arith.constant 2 : index
    %c0_28 = arith.constant 0 : index
    %c0_29 = arith.constant 0 : index
    %59 = vector.load %arg6[%c2_27, %c0_28, %c0_29] : memref<9x1x256xf32, #tpu.memory_space<vmem>>, vector<1x1x256xf32>
    %60 = vector.shape_cast %59 : vector<1x1x256xf32> to vector<1x256xf32>
    %61 = vector.broadcast %60 : vector<1x256xf32> to vector<24x256xf32>
    %62 = arith.mulf %58, %61 : vector<24x256xf32>
    %c2_30 = arith.constant 2 : index
    %c0_31 = arith.constant 0 : index
    %c0_32 = arith.constant 0 : index
    %63 = vector.load %arg4[%c2_30, %c0_31, %c0_32] : memref<9x24x1xf32, #tpu.memory_space<vmem>>, vector<1x24x1xf32>
    %64 = vector.shape_cast %63 : vector<1x24x1xf32> to vector<24x1xf32>
    %65 = vector.broadcast %64 : vector<24x1xf32> to vector<24x256xf32>
    %66 = arith.mulf %62, %65 : vector<24x256xf32>
    %67 = arith.addf %57, %66 : vector<24x256xf32>
    %c1_i32 = arith.constant 1 : i32
    %68 = tpu.dynamic_rotate %33 by %c1_i32 dim 1 : vector<24x256xf32>, i32 -> vector<24x256xf32>
    %c3_33 = arith.constant 3 : index
    %c0_34 = arith.constant 0 : index
    %c0_35 = arith.constant 0 : index
    %69 = vector.load %arg6[%c3_33, %c0_34, %c0_35] : memref<9x1x256xf32, #tpu.memory_space<vmem>>, vector<1x1x256xf32>
    %70 = vector.shape_cast %69 : vector<1x1x256xf32> to vector<1x256xf32>
    %71 = vector.broadcast %70 : vector<1x256xf32> to vector<24x256xf32>
    %72 = arith.mulf %68, %71 : vector<24x256xf32>
    %c3_36 = arith.constant 3 : index
    %c0_37 = arith.constant 0 : index
    %c0_38 = arith.constant 0 : index
    %73 = vector.load %arg4[%c3_36, %c0_37, %c0_38] : memref<9x24x1xf32, #tpu.memory_space<vmem>>, vector<1x24x1xf32>
    %74 = vector.shape_cast %73 : vector<1x24x1xf32> to vector<24x1xf32>
    %75 = vector.broadcast %74 : vector<24x1xf32> to vector<24x256xf32>
    %76 = arith.mulf %72, %75 : vector<24x256xf32>
    %77 = arith.addf %67, %76 : vector<24x256xf32>
    %c255_i32 = arith.constant 255 : i32
    %78 = tpu.dynamic_rotate %33 by %c255_i32 dim 1 : vector<24x256xf32>, i32 -> vector<24x256xf32>
    %c5 = arith.constant 5 : index
    %c0_39 = arith.constant 0 : index
    %c0_40 = arith.constant 0 : index
    %79 = vector.load %arg6[%c5, %c0_39, %c0_40] : memref<9x1x256xf32, #tpu.memory_space<vmem>>, vector<1x1x256xf32>
    %80 = vector.shape_cast %79 : vector<1x1x256xf32> to vector<1x256xf32>
    %81 = vector.broadcast %80 : vector<1x256xf32> to vector<24x256xf32>
    %82 = arith.mulf %78, %81 : vector<24x256xf32>
    %c5_41 = arith.constant 5 : index
    %c0_42 = arith.constant 0 : index
    %c0_43 = arith.constant 0 : index
    %83 = vector.load %arg4[%c5_41, %c0_42, %c0_43] : memref<9x24x1xf32, #tpu.memory_space<vmem>>, vector<1x24x1xf32>
    %84 = vector.shape_cast %83 : vector<1x24x1xf32> to vector<24x1xf32>
    %85 = vector.broadcast %84 : vector<24x1xf32> to vector<24x256xf32>
    %86 = arith.mulf %82, %85 : vector<24x256xf32>
    %87 = arith.addf %77, %86 : vector<24x256xf32>
    %c241_i32 = arith.constant 241 : i32
    %88 = tpu.dynamic_rotate %33 by %c241_i32 dim 1 : vector<24x256xf32>, i32 -> vector<24x256xf32>
    %c6 = arith.constant 6 : index
    %c0_44 = arith.constant 0 : index
    %c0_45 = arith.constant 0 : index
    %89 = vector.load %arg6[%c6, %c0_44, %c0_45] : memref<9x1x256xf32, #tpu.memory_space<vmem>>, vector<1x1x256xf32>
    %90 = vector.shape_cast %89 : vector<1x1x256xf32> to vector<1x256xf32>
    %91 = vector.broadcast %90 : vector<1x256xf32> to vector<24x256xf32>
    %92 = arith.mulf %88, %91 : vector<24x256xf32>
    %c6_46 = arith.constant 6 : index
    %c0_47 = arith.constant 0 : index
    %c0_48 = arith.constant 0 : index
    %93 = vector.load %arg4[%c6_46, %c0_47, %c0_48] : memref<9x24x1xf32, #tpu.memory_space<vmem>>, vector<1x24x1xf32>
    %94 = vector.shape_cast %93 : vector<1x24x1xf32> to vector<24x1xf32>
    %95 = vector.broadcast %94 : vector<24x1xf32> to vector<24x256xf32>
    %96 = arith.mulf %92, %95 : vector<24x256xf32>
    %97 = arith.addf %87, %96 : vector<24x256xf32>
    %c240_i32 = arith.constant 240 : i32
    %98 = tpu.dynamic_rotate %33 by %c240_i32 dim 1 : vector<24x256xf32>, i32 -> vector<24x256xf32>
    %c7 = arith.constant 7 : index
    %c0_49 = arith.constant 0 : index
    %c0_50 = arith.constant 0 : index
    %99 = vector.load %arg6[%c7, %c0_49, %c0_50] : memref<9x1x256xf32, #tpu.memory_space<vmem>>, vector<1x1x256xf32>
    %100 = vector.shape_cast %99 : vector<1x1x256xf32> to vector<1x256xf32>
    %101 = vector.broadcast %100 : vector<1x256xf32> to vector<24x256xf32>
    %102 = arith.mulf %98, %101 : vector<24x256xf32>
    %c7_51 = arith.constant 7 : index
    %c0_52 = arith.constant 0 : index
    %c0_53 = arith.constant 0 : index
    %103 = vector.load %arg4[%c7_51, %c0_52, %c0_53] : memref<9x24x1xf32, #tpu.memory_space<vmem>>, vector<1x24x1xf32>
    %104 = vector.shape_cast %103 : vector<1x24x1xf32> to vector<24x1xf32>
    %105 = vector.broadcast %104 : vector<24x1xf32> to vector<24x256xf32>
    %106 = arith.mulf %102, %105 : vector<24x256xf32>
    %107 = arith.addf %97, %106 : vector<24x256xf32>
    %c239_i32 = arith.constant 239 : i32
    %108 = tpu.dynamic_rotate %33 by %c239_i32 dim 1 : vector<24x256xf32>, i32 -> vector<24x256xf32>
    %c8 = arith.constant 8 : index
    %c0_54 = arith.constant 0 : index
    %c0_55 = arith.constant 0 : index
    %109 = vector.load %arg6[%c8, %c0_54, %c0_55] : memref<9x1x256xf32, #tpu.memory_space<vmem>>, vector<1x1x256xf32>
    %110 = vector.shape_cast %109 : vector<1x1x256xf32> to vector<1x256xf32>
    %111 = vector.broadcast %110 : vector<1x256xf32> to vector<24x256xf32>
    %112 = arith.mulf %108, %111 : vector<24x256xf32>
    %c8_56 = arith.constant 8 : index
    %c0_57 = arith.constant 0 : index
    %c0_58 = arith.constant 0 : index
    %113 = vector.load %arg4[%c8_56, %c0_57, %c0_58] : memref<9x24x1xf32, #tpu.memory_space<vmem>>, vector<1x24x1xf32>
    %114 = vector.shape_cast %113 : vector<1x24x1xf32> to vector<24x1xf32>
    %115 = vector.broadcast %114 : vector<24x1xf32> to vector<24x256xf32>
    %116 = arith.mulf %112, %115 : vector<24x256xf32>
    %117 = arith.addf %107, %116 : vector<24x256xf32>
    %c0_59 = arith.constant 0 : index
    %c0_60 = arith.constant 0 : index
    %118 = vector.load %arg5[%c0_59, %c0_60] : memref<24x1xf32, #tpu.memory_space<vmem>>, vector<24x1xf32>
    %119 = vector.broadcast %118 : vector<24x1xf32> to vector<24x256xf32>
    %120 = arith.addf %117, %119 : vector<24x256xf32>
    %cst_61 = arith.constant 0.000000e+00 : f32
    %121 = vector.broadcast %cst_61 : f32 to vector<24x256xf32>
    %122 = arith.maximumf %120, %121 : vector<24x256xf32>
    %c0_62 = arith.constant 0 : index
    %c0_63 = arith.constant 0 : index
    %123 = vector.load %arg7[%c0_62, %c0_63] : memref<16x24xf32, #tpu.memory_space<vmem>>, vector<16x24xf32>
    %cst_64 = arith.constant dense<0.000000e+00> : vector<16x256xf32>
    %124 = tpu.matmul %123, %122, %cst_64 {dimension_numbers = #tpu.dot_dimension_numbers<[1], [0], [0], [1], [0, 0, 1, 1], [], []>} : vector<16x24xf32>, vector<24x256xf32>, vector<16x256xf32> -> vector<16x256xf32>
    %c0_65 = arith.constant 0 : index
    %c0_66 = arith.constant 0 : index
    %125 = vector.load %arg8[%c0_65, %c0_66] : memref<16x1xf32, #tpu.memory_space<vmem>>, vector<16x1xf32>
    %126 = vector.broadcast %125 : vector<16x1xf32> to vector<16x256xf32>
    %127 = arith.addf %124, %126 : vector<16x256xf32>
    %cst_67 = arith.constant 0.000000e+00 : f32
    %128 = vector.broadcast %cst_67 : f32 to vector<16x256xf32>
    %129 = arith.maximumf %127, %128 : vector<16x256xf32>
    %130 = arith.truncf %129 : vector<16x256xf32> to vector<16x256xbf16>
    %c0_68 = arith.constant 0 : index
    %c0_69 = arith.constant 0 : index
    %c0_70 = arith.constant 0 : index
    %131 = vector.load %arg9[%c0_68, %c0_69, %c0_70] : memref<1x16x256xbf16, #tpu.memory_space<vmem>>, vector<1x16x256xbf16>
    %132 = vector.shape_cast %131 : vector<1x16x256xbf16> to vector<16x256xbf16>
    %133 = vector.shape_cast %130 : vector<16x256xbf16> to vector<1x16x256xbf16>
    tpu.vector_store %arg9[%c0_68, %c0_69, %c0_70], %133 {strides = array<i32>} : memref<1x16x256xbf16, #tpu.memory_space<vmem>>, vector<1x16x256xbf16>,
    return
  }
  func.func @transform_0(%arg0: i32) -> (i32, i32, i32) {
    %c0_i32 = arith.constant 0 : i32
    %c0_i32_0 = arith.constant 0 : i32
    %c0_i32_1 = arith.constant 0 : i32
    return %arg0, %c0_i32, %c0_i32_0 : i32, i32, i32
  }
  func.func @transform_1(%arg0: i32) -> (i32, i32, i32) {
    %c0_i32 = arith.constant 0 : i32
    %c0_i32_0 = arith.constant 0 : i32
    %c0_i32_1 = arith.constant 0 : i32
    %c0_i32_2 = arith.constant 0 : i32
    return %c0_i32, %c0_i32_0, %c0_i32_1 : i32, i32, i32
  }
  func.func @transform_2(%arg0: i32) -> (i32, i32) {
    %c0_i32 = arith.constant 0 : i32
    %c0_i32_0 = arith.constant 0 : i32
    %c0_i32_1 = arith.constant 0 : i32
    return %c0_i32, %c0_i32_0 : i32, i32
  }
  func.func @transform_3(%arg0: i32) -> (i32, i32, i32) {
    %c0_i32 = arith.constant 0 : i32
    %c0_i32_0 = arith.constant 0 : i32
    %c0_i32_1 = arith.constant 0 : i32
    %c0_i32_2 = arith.constant 0 : i32
    return %c0_i32, %c0_i32_0, %c0_i32_1 : i32, i32, i32
  }
  func.func @transform_4(%arg0: i32) -> (i32, i32) {
    %c0_i32 = arith.constant 0 : i32
    %c0_i32_0 = arith.constant 0 : i32
    %c0_i32_1 = arith.constant 0 : i32
    return %c0_i32, %c0_i32_0 : i32, i32
  }
  func.func @transform_5(%arg0: i32) -> (i32, i32, i32) {
    %c0_i32 = arith.constant 0 : i32
    %c0_i32_0 = arith.constant 0 : i32
    %c0_i32_1 = arith.constant 0 : i32
    %c0_i32_2 = arith.constant 0 : i32
    return %c0_i32, %c0_i32_0, %c0_i32_1 : i32, i32, i32
  }
  func.func @transform_6(%arg0: i32) -> (i32, i32) {
    %c0_i32 = arith.constant 0 : i32
    %c0_i32_0 = arith.constant 0 : i32
    %c0_i32_1 = arith.constant 0 : i32
    return %c0_i32, %c0_i32_0 : i32, i32
  }
  func.func @transform_7(%arg0: i32) -> (i32, i32) {
    %c0_i32 = arith.constant 0 : i32
    %c0_i32_0 = arith.constant 0 : i32
    %c0_i32_1 = arith.constant 0 : i32
    return %c0_i32, %c0_i32_0 : i32, i32
  }
  func.func @transform_8(%arg0: i32) -> (i32, i32, i32) {
    %c0_i32 = arith.constant 0 : i32
    %c0_i32_0 = arith.constant 0 : i32
    %c0_i32_1 = arith.constant 0 : i32
    return %arg0, %c0_i32, %c0_i32_0 : i32, i32, i32
  }
}

</mosaic_0001>

<llo_original>
// kernel: spnas_final_block.1
$region0: #{spnas_final_block.1}
  #allocation0 [shape = 'u32[]', space=smem, size = 0x4, offset = 0x4, fixed_abs, tag = 'smem constant byte address 0x4 - core index']
  #allocation1 [shape = 'u32[72,128]{1,0:T(1,128)}', space=vmem, size = 0x9000, scoped, tag = 'internal scratch']
  %s0 = inlined_call_operand.vmem [shape: f32[2,4,256], index: 0, kind: input, shape index: {}]
  %s1 = inlined_call_operand.vmem [shape: f32[4,24,1], index: 1, kind: input, shape index: {}]
  %s2 = inlined_call_operand.vmem [shape: f32[24,1], index: 2, kind: input, shape index: {}]
  %s3 = inlined_call_operand.vmem [shape: f32[9,24,1], index: 3, kind: input, shape index: {}]
  %s4 = inlined_call_operand.vmem [shape: f32[24,1], index: 4, kind: input, shape index: {}]
  %s5 = inlined_call_operand.vmem [shape: f32[9,1,256], index: 5, kind: input, shape index: {}]
  %s6 = inlined_call_operand.vmem [shape: f32[16,24], index: 6, kind: input, shape index: {}]
  %s7 = inlined_call_operand.vmem [shape: f32[16,1], index: 7, kind: input, shape index: {}]
  %s8 = inlined_call_operand.vmem [shape: bf16[2,16,256], index: 8, kind: output, shape index: {}]
  %s9 = sld [smem:[#allocation0]]
  $region65: #{spnas_final_block.1} parent=0
    _
  %s11 = ssub.s32 1, %s9
  %s12 = scalar_select 0, %s11, %s9
  loop: start=0, step=1, limit=4
  $region2: #{spnas_final_block.1} parent=0 // loop_pre_header
    _
  $region3: #{spnas_final_block.1} parent=0 // loop_header
    %s14 = sphi 0, %s18
    %p15 = scmp.ge.s32.totalorder %s14, 4
    %s24 = sphi 0, %s26
    %s27 = sphi 0, %s24
    %s28 = sphi 0, %s27
    %s44 = sphi 0, %s28
    %s48 = sphi 0, %s48
    %s50 = sphi 0, %s48
    %s51 = sphi 0, %s50
    %s65 = sphi 0, %s51
    %s69 = sphi 0, %s69
    %s71 = sphi 0, %s69
    %s72 = sphi 0, %s71
    %s86 = sphi 0, %s72
    %s90 = sphi 0, %s90
    %s92 = sphi 0, %s90
    %s93 = sphi 0, %s92
    %s107 = sphi 0, %s93
    %s111 = sphi 0, %s111
    %s113 = sphi 0, %s111
    %s114 = sphi 0, %s113
    %s128 = sphi 0, %s114
    %s132 = sphi 0, %s132
    %s134 = sphi 0, %s132
    %s135 = sphi 0, %s134
    %s149 = sphi 0, %s135
    %s153 = sphi 0, %s153
    %s155 = sphi 0, %s153
    %s156 = sphi 0, %s155
    %s170 = sphi 0, %s156
    %s174 = sphi 0, %s174
    %s176 = sphi 0, %s174
    %s177 = sphi 0, %s176
    %s191 = sphi 0, %s177
    %s197 = sphi 0, %s199
    %s200 = sphi 0, %s197
    %s201 = sphi 0, %s200
    %s217 = sphi 0, %s201
  $region4: #{spnas_final_block.1} parent=0 // loop_header_branch
    %17 = sbr.rel (%p15) target = $region8
  $region5: #{spnas_final_block.1} parent=0 // loop_body
    %s19 = ssub.s32 %s14, 1
    %s20 = ssub.s32 %s14, 2
    %s21 = sadd.s32 %s14, 1
    %s22 = ssub.s32 %s14, %s21
    %p23 = scmp.eq.s32.totalorder %s22, 0
    %s25 = sadd.s32 %s24, 1
    %s26 = scalar_select %p23, %s24, %s25
    %p29 = pneg %p23
    %p30 = scmp.eq.s32.totalorder %s14, 1
    %p31 = por %p29, %p30
    %p32 = scmp.ne.s32.totalorder %s24, %s27
    %p33 = scmp.eq.s32.totalorder %s14, 0
    %p34 = por %p32, %p33
    %p35 = scmp.ne.s32.totalorder %s24, %s27
    %p36 = scmp.eq.s32.totalorder %s19, 1
    %p37 = por %p35, %p36
    %p38 = scmp.ne.s32.totalorder %s27, %s28
    %p39 = scmp.eq.s32.totalorder %s19, 0
    %p40 = por %p38, %p39
    %p41 = scmp.ne.s32.totalorder %s27, %s28
    %p42 = scmp.eq.s32.totalorder %s20, 1
    %p43 = por %p41, %p42
    %p45 = scmp.ne.s32.totalorder %s28, %s44
    %p46 = scmp.eq.s32.totalorder %s20, 0
    %p47 = por %p45, %p46
    %s49 = sadd.s32 %s48, 1
    %p52 = scmp.eq.s32.totalorder %s14, 1
    %p53 = scmp.ne.s32.totalorder %s48, %s50
    %p54 = scmp.eq.s32.totalorder %s14, 0
    %p55 = por %p53, %p54
    %p56 = scmp.ne.s32.totalorder %s48, %s50
    %p57 = scmp.eq.s32.totalorder %s19, 1
    %p58 = por %p56, %p57
    %p59 = scmp.ne.s32.totalorder %s50, %s51
    %p60 = scmp.eq.s32.totalorder %s19, 0
    %p61 = por %p59, %p60
    %p62 = scmp.ne.s32.totalorder %s50, %s51
    %p63 = scmp.eq.s32.totalorder %s20, 1
    %p64 = por %p62, %p63
    %p66 = scmp.ne.s32.totalorder %s51, %s65
    %p67 = scmp.eq.s32.totalorder %s20, 0
    %p68 = por %p66, %p67
    %s70 = sadd.s32 %s69, 1
    %p73 = scmp.eq.s32.totalorder %s14, 1
    %p74 = scmp.ne.s32.totalorder %s69, %s71
    %p75 = scmp.eq.s32.totalorder %s14, 0
    %p76 = por %p74, %p75
    %p77 = scmp.ne.s32.totalorder %s69, %s71
    %p78 = scmp.eq.s32.totalorder %s19, 1
    %p79 = por %p77, %p78
    %p80 = scmp.ne.s32.totalorder %s71, %s72
    %p81 = scmp.eq.s32.totalorder %s19, 0
    %p82 = por %p80, %p81
    %p83 = scmp.ne.s32.totalorder %s71, %s72
    %p84 = scmp.eq.s32.totalorder %s20, 1
    %p85 = por %p83, %p84
    %p87 = scmp.ne.s32.totalorder %s72, %s86
    %p88 = scmp.eq.s32.totalorder %s20, 0
    %p89 = por %p87, %p88
    %s91 = sadd.s32 %s90, 1
    %p94 = scmp.eq.s32.totalorder %s14, 1
    %p95 = scmp.ne.s32.totalorder %s90, %s92
    %p96 = scmp.eq.s32.totalorder %s14, 0
    %p97 = por %p95, %p96
    %p98 = scmp.ne.s32.totalorder %s90, %s92
    %p99 = scmp.eq.s32.totalorder %s19, 1
    %p100 = por %p98, %p99
    %p101 = scmp.ne.s32.totalorder %s92, %s93
    %p102 = scmp.eq.s32.totalorder %s19, 0
    %p103 = por %p101, %p102
    %p104 = scmp.ne.s32.totalorder %s92, %s93
    %p105 = scmp.eq.s32.totalorder %s20, 1
    %p106 = por %p104, %p105
    %p108 = scmp.ne.s32.totalorder %s93, %s107
    %p109 = scmp.eq.s32.totalorder %s20, 0
    %p110 = por %p108, %p109
    %s112 = sadd.s32 %s111, 1
    %p115 = scmp.eq.s32.totalorder %s14, 1
    %p116 = scmp.ne.s32.totalorder %s111, %s113
    %p117 = scmp.eq.s32.totalorder %s14, 0
    %p118 = por %p116, %p117
    %p119 = scmp.ne.s32.totalorder %s111, %s113
    %p120 = scmp.eq.s32.totalorder %s19, 1
    %p121 = por %p119, %p120
    %p122 = scmp.ne.s32.totalorder %s113, %s114
    %p123 = scmp.eq.s32.totalorder %s19, 0
    %p124 = por %p122, %p123
    %p125 = scmp.ne.s32.totalorder %s113, %s114
    %p126 = scmp.eq.s32.totalorder %s20, 1
    %p127 = por %p125, %p126
    %p129 = scmp.ne.s32.totalorder %s114, %s128
    %p130 = scmp.eq.s32.totalorder %s20, 0
    %p131 = por %p129, %p130
    %s133 = sadd.s32 %s132, 1
    %p136 = scmp.eq.s32.totalorder %s14, 1
    %p137 = scmp.ne.s32.totalorder %s132, %s134
    %p138 = scmp.eq.s32.totalorder %s14, 0
    %p139 = por %p137, %p138
    %p140 = scmp.ne.s32.totalorder %s132, %s134
    %p141 = scmp.eq.s32.totalorder %s19, 1
    %p142 = por %p140, %p141
    %p143 = scmp.ne.s32.totalorder %s134, %s135
    %p144 = scmp.eq.s32.totalorder %s19, 0
    %p145 = por %p143, %p144
    %p146 = scmp.ne.s32.totalorder %s134, %s135
    %p147 = scmp.eq.s32.totalorder %s20, 1
    %p148 = por %p146, %p147
    %p150 = scmp.ne.s32.totalorder %s135, %s149
    %p151 = scmp.eq.s32.totalorder %s20, 0
    %p152 = por %p150, %p151
    %s154 = sadd.s32 %s153, 1
    %p157 = scmp.eq.s32.totalorder %s14, 1
    %p158 = scmp.ne.s32.totalorder %s153, %s155
    %p159 = scmp.eq.s32.totalorder %s14, 0
    %p160 = por %p158, %p159
    %p161 = scmp.ne.s32.totalorder %s153, %s155
    %p162 = scmp.eq.s32.totalorder %s19, 1
    %p163 = por %p161, %p162
    %p164 = scmp.ne.s32.totalorder %s155, %s156
    %p165 = scmp.eq.s32.totalorder %s19, 0
    %p166 = por %p164, %p165
    %p167 = scmp.ne.s32.totalorder %s155, %s156
    %p168 = scmp.eq.s32.totalorder %s20, 1
    %p169 = por %p167, %p168
    %p171 = scmp.ne.s32.totalorder %s156, %s170
    %p172 = scmp.eq.s32.totalorder %s20, 0
    %p173 = por %p171, %p172
    %s175 = sadd.s32 %s174, 1
    %p178 = scmp.eq.s32.totalorder %s14, 1
    %p179 = scmp.ne.s32.totalorder %s174, %s176
    %p180 = scmp.eq.s32.totalorder %s14, 0
    %p181 = por %p179, %p180
    %p182 = scmp.ne.s32.totalorder %s174, %s176
    %p183 = scmp.eq.s32.totalorder %s19, 1
    %p184 = por %p182, %p183
    %p185 = scmp.ne.s32.totalorder %s176, %s177
    %p186 = scmp.eq.s32.totalorder %s19, 0
    %p187 = por %p185, %p186
    %p188 = scmp.ne.s32.totalorder %s176, %s177
    %p189 = scmp.eq.s32.totalorder %s20, 1
    %p190 = por %p188, %p189
    %p192 = scmp.ne.s32.totalorder %s177, %s191
    %p193 = scmp.eq.s32.totalorder %s20, 0
    %p194 = por %p192, %p193
    %s195 = ssub.s32 %s14, %s21
    %p196 = scmp.eq.s32.totalorder %s195, 0
    %s198 = sadd.s32 %s197, 1
    %s199 = scalar_select %p196, %s197, %s198
    %p202 = pneg %p196
    %p203 = scmp.eq.s32.totalorder %s14, 1
    %p204 = por %p202, %p203
    %p205 = scmp.ne.s32.totalorder %s197, %s200
    %p206 = scmp.eq.s32.totalorder %s14, 0
    %p207 = por %p205, %p206
    %p208 = scmp.ne.s32.totalorder %s197, %s200
    %p209 = scmp.eq.s32.totalorder %s19, 1
    %p210 = por %p208, %p209
    %p211 = scmp.ne.s32.totalorder %s200, %s201
    %p212 = scmp.eq.s32.totalorder %s19, 0
    %p213 = por %p211, %p212
    %p214 = scmp.ne.s32.totalorder %s200, %s201
    %p215 = scmp.eq.s32.totalorder %s20, 1
    %p216 = por %p214, %p215
    %p218 = scmp.ne.s32.totalorder %s201, %s217
    %p219 = scmp.eq.s32.totalorder %s20, 0
    %p220 = por %p218, %p219
    %p221 = scmp.le.s32.totalorder 1, %s14
    %p222 = scmp.lt.s32.totalorder %s14, 3
    %p223 = pnand %p221, %p222
    %p224 = pneg %p223
    // Predicated region
    $region9: #{spnas_final_block.1} parent=5 // pred_check
      _
    $region10: #{spnas_final_block.1} parent=5 // pred_check_branch
      %226 = sbr.rel (%p223) target = $region12
    $region11: #{spnas_final_block.1} parent=5 // pred_region
      %s227 = ssub.s32 %s14, 1
      // Predicated region
      $region13: #{spnas_final_block.1} parent=11 // pred_check
        %p228 = pneg %p61
      $region14: #{spnas_final_block.1} parent=11 // pred_check_branch
        %230 = sbr.rel (%p228) target = $region16
      $region15: #{spnas_final_block.1} parent=11 // pred_region
        _
      $region16: #{spnas_final_block.1} parent=11 // pred_fallthru
        _
      // Predicated region
      $region17: #{spnas_final_block.1} parent=11 // pred_check
        %p231 = pneg %p82
      $region18: #{spnas_final_block.1} parent=11 // pred_check_branch
        %233 = sbr.rel (%p231) target = $region20
      $region19: #{spnas_final_block.1} parent=11 // pred_region
        _
      $region20: #{spnas_final_block.1} parent=11 // pred_fallthru
        _
      // Predicated region
      $region21: #{spnas_final_block.1} parent=11 // pred_check
        %p234 = pneg %p103
      $region22: #{spnas_final_block.1} parent=11 // pred_check_branch
        %236 = sbr.rel (%p234) target = $region24
      $region23: #{spnas_final_block.1} parent=11 // pred_region
        _
      $region24: #{spnas_final_block.1} parent=11 // pred_fallthru
        _
      // Predicated region
      $region25: #{spnas_final_block.1} parent=11 // pred_check
        %p237 = pneg %p124
      $region26: #{spnas_final_block.1} parent=11 // pred_check_branch
        %239 = sbr.rel (%p237) target = $region28
      $region27: #{spnas_final_block.1} parent=11 // pred_region
        _
      $region28: #{spnas_final_block.1} parent=11 // pred_fallthru
        _
      // Predicated region
      $region29: #{spnas_final_block.1} parent=11 // pred_check
        %p240 = pneg %p145
      $region30: #{spnas_final_block.1} parent=11 // pred_check_branch
        %242 = sbr.rel (%p240) target = $region32
      $region31: #{spnas_final_block.1} parent=11 // pred_region
        _
      $region32: #{spnas_final_block.1} parent=11 // pred_fallthru
        _
      // Predicated region
      $region33: #{spnas_final_block.1} parent=11 // pred_check
        %p243 = pneg %p166
      $region34: #{spnas_final_block.1} parent=11 // pred_check_branch
        %245 = sbr.rel (%p243) target = $region36
      $region35: #{spnas_final_block.1} parent=11 // pred_region
        _
      $region36: #{spnas_final_block.1} parent=11 // pred_fallthru
        _
      // Predicated region
      $region37: #{spnas_final_block.1} parent=11 // pred_check
        %p246 = pneg %p187
      $region38: #{spnas_final_block.1} parent=11 // pred_check_branch
        %248 = sbr.rel (%p246) target = $region40
      $region39: #{spnas_final_block.1} parent=11 // pred_region
        _
      $region40: #{spnas_final_block.1} parent=11 // pred_fallthru
        _
    $region12: #{spnas_final_block.1} parent=5 // pred_fallthru
      _
    %p249 = scmp.lt.s32.totalorder %s14, 2
    // Predicated region
    $region41: #{spnas_final_block.1} parent=5 // pred_check
      %p250 = pneg %p249
    $region42: #{spnas_final_block.1} parent=5 // pred_check_branch
      %252 = sbr.rel (%p250) target = $region44
    $region43: #{spnas_final_block.1} parent=5 // pred_region
      // Predicated region
      $region45: #{spnas_final_block.1} parent=43 // pred_check
        %p253 = pneg %p34
      $region46: #{spnas_final_block.1} parent=43 // pred_check_branch
        %255 = sbr.rel (%p253) target = $region48
      $region47: #{spnas_final_block.1} parent=43 // pred_region
        %p256 = scmp.lt.s32.totalorder %s14, 1
        %s257 = scalar_select %p256, %s14, 1
        %s258 = smul.addr %s257, 2
        %s259 = smul.addr %s258, 4
        %s260 = scalar_lea.vmem %s0, %s259
      $region48: #{spnas_final_block.1} parent=43 // pred_fallthru
        _
    $region44: #{spnas_final_block.1} parent=5 // pred_fallthru
      _
    %p261 = scmp.le.s32.totalorder 1, %s14
    %p262 = scmp.lt.s32.totalorder %s14, 3
    %p263 = pnand %p261, %p262
    %p264 = pneg %p263
    // Predicated region
    $region49: #{spnas_final_block.1} parent=5 // pred_check
      _
    $region50: #{spnas_final_block.1} parent=5 // pred_check_branch
      %266 = sbr.rel (%p263) target = $region52
    $region51: #{spnas_final_block.1} parent=5 // pred_region
      %s267 = ssub.s32 %s14, 1
      %p268 = scmp.lt.s32.totalorder %s19, 1
      %s269 = scalar_select %p268, %s19, 1
      %s270 = smul.addr %s269, 2
      %s271 = smul.addr %s270, 4
      %s272 = scalar_lea.vmem %s0, %s271
      %p273 = pneg %p40
      %p274 = pneg %p37
      %p275 = pneg %p61
      %p276 = pneg %p58
      %p277 = pneg %p82
      %p278 = pneg %p79
      %p279 = pneg %p103
      %p280 = pneg %p100
      %p281 = pneg %p124
      %p282 = pneg %p121
      %p283 = pneg %p145
      %p284 = pneg %p142
      %p285 = pneg %p166
      %p286 = pneg %p163
      %p287 = pneg %p187
      %p288 = pneg %p184
      %p289 = pneg %p213
      %p290 = pneg %p210
      %p291 = scmp.lt.s32.totalorder %s19, 1
      %s292 = scalar_select %p291, %s19, 1
      %s293 = smul.addr %s292, 4
      %s294 = smul.addr %s293, 4
      %s295 = scalar_lea.vmem %s8, %s294
      %p296 = scmp.lt.s32.totalorder %s19, 1
      %s297 = scalar_select %p296, %s19, 1
      %s298 = smul.addr %s297, 2
      %s299 = smul.addr %s298, 4
      %s300 = scalar_lea.vmem %s0, %s299
      %p301 = scmp.lt.s32.totalorder %s19, 1
      %s302 = scalar_select %p301, %s19, 1
      %s303 = smul.addr %s302, 4
      %s304 = smul.addr %s303, 4
      %s305 = scalar_lea.vmem %s8, %s304
      %v306 = vld [vmem:[%s300] sm:$0xff]
      %v307 = vld [vmem:[%s1] sm:$0xff]
      %v308 = vld [vmem:[%s1 + $0x8] sm:$0xff]
      %v309 = vld [vmem:[%s1 + $0x10] sm:$0xff]
      %311 = vset.pattern.permute.xlu0 0
      %312 = vperm.xlu0 %311, %v307
      %v313 = vpop.permute.xlu0 %312
      %316 = vset.pattern.permute.xlu0 0
      %317 = vperm.xlu0 %316, %v308
      %v318 = vpop.permute.xlu0 %317
      %321 = vset.pattern.permute.xlu0 0
      %322 = vperm.xlu0 %321, %v309
      %v323 = vpop.permute.xlu0 %322
      %v326 = vperm.slane %v306, 0
      %v327 = vperm.slane %v306, 4
      %v330 = vperm.slane %v326, 0
      %v331 = vperm.slane %v327, 0
      %v332 = vmul.f32 %v313, %v330
      %v333 = vmul.f32 %v313, %v331
      %v334 = vmul.f32 %v318, %v330
      %v335 = vmul.f32 %v318, %v331
      %v336 = vmul.f32 %v323, %v330
      %v337 = vmul.f32 %v323, %v331
      %s338 = scalar_lea.vmem %s1, 24
      %v339 = vld [vmem:[%s338] sm:$0xff]
      %v340 = vld [vmem:[%s338 + $0x8] sm:$0xff]
      %v341 = vld [vmem:[%s338 + $0x10] sm:$0xff]
      %343 = vset.pattern.permute.xlu0 0
      %344 = vperm.xlu0 %343, %v339
      %v345 = vpop.permute.xlu0 %344
      %348 = vset.pattern.permute.xlu0 0
      %349 = vperm.xlu0 %348, %v340
      %v350 = vpop.permute.xlu0 %349
      %353 = vset.pattern.permute.xlu0 0
      %354 = vperm.xlu0 %353, %v341
      %v355 = vpop.permute.xlu0 %354
      %v357 = vperm.slane %v306, 1
      %v358 = vperm.slane %v306, 5
      %v361 = vperm.slane %v357, 1
      %v362 = vperm.slane %v358, 1
      %v363 = vmul.f32 %v345, %v361
      %v364 = vmul.f32 %v345, %v362
      %v365 = vmul.f32 %v350, %v361
      %v366 = vmul.f32 %v350, %v362
      %v367 = vmul.f32 %v355, %v361
      %v368 = vmul.f32 %v355, %v362
      %v369 = vadd.f32 %v332, %v363
      %v370 = vadd.f32 %v333, %v364
      %v371 = vadd.f32 %v334, %v365
      %v372 = vadd.f32 %v335, %v366
      %v373 = vadd.f32 %v336, %v367
      %v374 = vadd.f32 %v337, %v368
      %s375 = scalar_lea.vmem %s1, 48
      %v376 = vld [vmem:[%s375] sm:$0xff]
      %v377 = vld [vmem:[%s375 + $0x8] sm:$0xff]
      %v378 = vld [vmem:[%s375 + $0x10] sm:$0xff]
      %380 = vset.pattern.permute.xlu0 0
      %381 = vperm.xlu0 %380, %v376
      %v382 = vpop.permute.xlu0 %381
      %385 = vset.pattern.permute.xlu0 0
      %386 = vperm.xlu0 %385, %v377
      %v387 = vpop.permute.xlu0 %386
      %390 = vset.pattern.permute.xlu0 0
      %391 = vperm.xlu0 %390, %v378
      %v392 = vpop.permute.xlu0 %391
      %v394 = vperm.slane %v306, 2
      %v395 = vperm.slane %v306, 6
      %v398 = vperm.slane %v394, 2
      %v399 = vperm.slane %v395, 2
      %v400 = vmul.f32 %v382, %v398
      %v401 = vmul.f32 %v382, %v399
      %v402 = vmul.f32 %v387, %v398
      %v403 = vmul.f32 %v387, %v399
      %v404 = vmul.f32 %v392, %v398
      %v405 = vmul.f32 %v392, %v399
      %v406 = vadd.f32 %v369, %v400
      %v407 = vadd.f32 %v370, %v401
      %v408 = vadd.f32 %v371, %v402
      %v409 = vadd.f32 %v372, %v403
      %v410 = vadd.f32 %v373, %v404
      %v411 = vadd.f32 %v374, %v405
      %s412 = scalar_lea.vmem %s1, 72
      %v413 = vld [vmem:[%s412] sm:$0xff]
      %v414 = vld [vmem:[%s412 + $0x8] sm:$0xff]
      %v415 = vld [vmem:[%s412 + $0x10] sm:$0xff]
      %417 = vset.pattern.permute.xlu0 0
      %418 = vperm.xlu0 %417, %v413
      %v419 = vpop.permute.xlu0 %418
      %422 = vset.pattern.permute.xlu0 0
      %423 = vperm.xlu0 %422, %v414
      %v424 = vpop.permute.xlu0 %423
      %427 = vset.pattern.permute.xlu0 0
      %428 = vperm.xlu0 %427, %v415
      %v429 = vpop.permute.xlu0 %428
      %v431 = vperm.slane %v306, 3
      %v432 = vperm.slane %v306, 7
      %v435 = vperm.slane %v431, 3
      %v436 = vperm.slane %v432, 3
      %v437 = vmul.f32 %v419, %v435
      %v438 = vmul.f32 %v419, %v436
      %v439 = vmul.f32 %v424, %v435
      %v440 = vmul.f32 %v424, %v436
      %v441 = vmul.f32 %v429, %v435
      %v442 = vmul.f32 %v429, %v436
      %v443 = vadd.f32 %v406, %v437
      %v444 = vadd.f32 %v407, %v438
      %v445 = vadd.f32 %v408, %v439
      %v446 = vadd.f32 %v409, %v440
      %v447 = vadd.f32 %v410, %v441
      %v448 = vadd.f32 %v411, %v442
      %v449 = vld [vmem:[%s2] sm:$0xff]
      %v450 = vld [vmem:[%s2 + $0x8] sm:$0xff]
      %v451 = vld [vmem:[%s2 + $0x10] sm:$0xff]
      %453 = vset.pattern.permute.xlu0 0
      %454 = vperm.xlu0 %453, %v449
      %v455 = vpop.permute.xlu0 %454
      %458 = vset.pattern.permute.xlu0 0
      %459 = vperm.xlu0 %458, %v450
      %v460 = vpop.permute.xlu0 %459
      %463 = vset.pattern.permute.xlu0 0
      %464 = vperm.xlu0 %463, %v451
      %v465 = vpop.permute.xlu0 %464
      %v467 = vadd.f32 %v443, %v455
      %v468 = vadd.f32 %v444, %v455
      %v469 = vadd.f32 %v445, %v460
      %v470 = vadd.f32 %v446, %v460
      %v471 = vadd.f32 %v447, %v465
      %v472 = vadd.f32 %v448, %v465
      %v473 = vmax.f32 %v467, 0.0
      %v474 = vmax.f32 %v468, 0.0
      %v475 = vmax.f32 %v469, 0.0
      %v476 = vmax.f32 %v470, 0.0
      %v477 = vmax.f32 %v471, 0.0
      %v478 = vmax.f32 %v472, 0.0
      %s479 = scalar_lea.vmem %s3, 96
      %v480 = vld [vmem:[%s479] sm:$0xff]
      %v481 = vld [vmem:[%s479 + $0x8] sm:$0xff]
      %v482 = vld [vmem:[%s479 + $0x10] sm:$0xff]
      %484 = vset.pattern.permute.xlu0 0
      %485 = vperm.xlu0 %484, %v480
      %v486 = vpop.permute.xlu0 %485
      %489 = vset.pattern.permute.xlu0 0
      %490 = vperm.xlu0 %489, %v481
      %v491 = vpop.permute.xlu0 %490
      %494 = vset.pattern.permute.xlu0 0
      %495 = vperm.xlu0 %494, %v482
      %v496 = vpop.permute.xlu0 %495
      %v498 = vmul.f32 %v473, %v486
      %v499 = vmul.f32 %v474, %v486
      %v500 = vmul.f32 %v475, %v491
      %v501 = vmul.f32 %v476, %v491
      %v502 = vmul.f32 %v477, %v496
      %v503 = vmul.f32 %v478, %v496
      %504 = vrot.lane.b32.xlu0 %v473, 17
      %v505 = vpop.permute.xlu0 %504
      %506 = vrot.lane.b32.xlu0 %v475, 17
      %v507 = vpop.permute.xlu0 %506
      %508 = vrot.lane.b32.xlu0 %v477, 17
      %v509 = vpop.permute.xlu0 %508
      %510 = vrot.lane.b32.xlu0 %v474, 17
      %v511 = vpop.permute.xlu0 %510
      %512 = vrot.lane.b32.xlu0 %v476, 17
      %v513 = vpop.permute.xlu0 %512
      %514 = vrot.lane.b32.xlu0 %v478, 17
      %v515 = vpop.permute.xlu0 %514
      %v516 = vlaneseq
      %v517 = vand.u32 %v516, 127
      %vm518 = vcmp.lt.s32.totalorder %v517, 17
      %v519 = vsel %vm518, %v505, %v511
      %v520 = vsel %vm518, %v507, %v513
      %v521 = vsel %vm518, %v509, %v515
      %v522 = vsel %vm518, %v511, %v505
      %v523 = vsel %vm518, %v513, %v507
      %v524 = vsel %vm518, %v515, %v509
      %v525 = vld [vmem:[%s5] sm:$0x3]
      %v527 = vperm.slane %v525, 0
      %v528 = vperm.slane %v525, 1
      %v531 = vmul.f32 %v522, %v527
      %v532 = vmul.f32 %v519, %v528
      %v533 = vmul.f32 %v523, %v527
      %v534 = vmul.f32 %v520, %v528
      %v535 = vmul.f32 %v524, %v527
      %v536 = vmul.f32 %v521, %v528
      %v537 = vld [vmem:[%s3] sm:$0xff]
      %v538 = vld [vmem:[%s3 + $0x8] sm:$0xff]
      %v539 = vld [vmem:[%s3 + $0x10] sm:$0xff]
      %541 = vset.pattern.permute.xlu0 0
      %542 = vperm.xlu0 %541, %v537
      %v543 = vpop.permute.xlu0 %542
      %546 = vset.pattern.permute.xlu0 0
      %547 = vperm.xlu0 %546, %v538
      %v548 = vpop.permute.xlu0 %547
      %551 = vset.pattern.permute.xlu0 0
      %552 = vperm.xlu0 %551, %v539
      %v553 = vpop.permute.xlu0 %552
      %v555 = vmul.f32 %v531, %v543
      %v556 = vmul.f32 %v532, %v543
      %v557 = vmul.f32 %v533, %v548
      %v558 = vmul.f32 %v534, %v548
      %v559 = vmul.f32 %v535, %v553
      %v560 = vmul.f32 %v536, %v553
      %v561 = vadd.f32 %v498, %v555
      %v562 = vadd.f32 %v499, %v556
      %v563 = vadd.f32 %v500, %v557
      %v564 = vadd.f32 %v501, %v558
      %v565 = vadd.f32 %v502, %v559
      %v566 = vadd.f32 %v503, %v560
      %567 = vrot.lane.b32.xlu0 %v473, 16
      %v568 = vpop.permute.xlu0 %567
      %569 = vrot.lane.b32.xlu0 %v475, 16
      %v570 = vpop.permute.xlu0 %569
      %571 = vrot.lane.b32.xlu0 %v477, 16
      %v572 = vpop.permute.xlu0 %571
      %573 = vrot.lane.b32.xlu0 %v474, 16
      %v574 = vpop.permute.xlu0 %573
      %575 = vrot.lane.b32.xlu0 %v476, 16
      %v576 = vpop.permute.xlu0 %575
      %577 = vrot.lane.b32.xlu0 %v478, 16
      %v578 = vpop.permute.xlu0 %577
      %vm579 = vcmp.lt.s32.totalorder %v517, 16
      %v580 = vsel %vm579, %v568, %v574
      %v581 = vsel %vm579, %v570, %v576
      %v582 = vsel %vm579, %v572, %v578
      %v583 = vsel %vm579, %v574, %v568
      %v584 = vsel %vm579, %v576, %v570
      %v585 = vsel %vm579, %v578, %v572
      %s586 = scalar_lea.vmem %s5, 2
      %v587 = vld [vmem:[%s586] sm:$0x3]
      %v589 = vperm.slane %v587, 0
      %v590 = vperm.slane %v587, 1
      %v593 = vmul.f32 %v583, %v589
      %v594 = vmul.f32 %v580, %v590
      %v595 = vmul.f32 %v584, %v589
      %v596 = vmul.f32 %v581, %v590
      %v597 = vmul.f32 %v585, %v589
      %v598 = vmul.f32 %v582, %v590
      %s599 = scalar_lea.vmem %s3, 24
      %v600 = vld [vmem:[%s599] sm:$0xff]
      %v601 = vld [vmem:[%s599 + $0x8] sm:$0xff]
      %v602 = vld [vmem:[%s599 + $0x10] sm:$0xff]
      %604 = vset.pattern.permute.xlu0 0
      %605 = vperm.xlu0 %604, %v600
      %v606 = vpop.permute.xlu0 %605
      %609 = vset.pattern.permute.xlu0 0
      %610 = vperm.xlu0 %609, %v601
      %v611 = vpop.permute.xlu0 %610
      %614 = vset.pattern.permute.xlu0 0
      %615 = vperm.xlu0 %614, %v602
      %v616 = vpop.permute.xlu0 %615
      %v618 = vmul.f32 %v593, %v606
      %v619 = vmul.f32 %v594, %v606
      %v620 = vmul.f32 %v595, %v611
      %v621 = vmul.f32 %v596, %v611
      %v622 = vmul.f32 %v597, %v616
      %v623 = vmul.f32 %v598, %v616
      %v624 = vadd.f32 %v561, %v618
      %v625 = vadd.f32 %v562, %v619
      %v626 = vadd.f32 %v563, %v620
      %v627 = vadd.f32 %v564, %v621
      %v628 = vadd.f32 %v565, %v622
      %v629 = vadd.f32 %v566, %v623
      %630 = vrot.lane.b32.xlu0 %v473, 15
      %v631 = vpop.permute.xlu0 %630
      %632 = vrot.lane.b32.xlu0 %v475, 15
      %v633 = vpop.permute.xlu0 %632
      %634 = vrot.lane.b32.xlu0 %v477, 15
      %v635 = vpop.permute.xlu0 %634
      %636 = vrot.lane.b32.xlu0 %v474, 15
      %v637 = vpop.permute.xlu0 %636
      %638 = vrot.lane.b32.xlu0 %v476, 15
      %v639 = vpop.permute.xlu0 %638
      %640 = vrot.lane.b32.xlu0 %v478, 15
      %v641 = vpop.permute.xlu0 %640
      %vm642 = vcmp.lt.s32.totalorder %v517, 15
      %v643 = vsel %vm642, %v631, %v637
      %v644 = vsel %vm642, %v633, %v639
      %v645 = vsel %vm642, %v635, %v641
      %v646 = vsel %vm642, %v637, %v631
      %v647 = vsel %vm642, %v639, %v633
      %v648 = vsel %vm642, %v641, %v635
      %s649 = scalar_lea.vmem %s5, 4
      %v650 = vld [vmem:[%s649] sm:$0x3]
      %v652 = vperm.slane %v650, 0
      %v653 = vperm.slane %v650, 1
      %v656 = vmul.f32 %v646, %v652
      %v657 = vmul.f32 %v643, %v653
      %v658 = vmul.f32 %v647, %v652
      %v659 = vmul.f32 %v644, %v653
      %v660 = vmul.f32 %v648, %v652
      %v661 = vmul.f32 %v645, %v653
      %s662 = scalar_lea.vmem %s3, 48
      %v663 = vld [vmem:[%s662] sm:$0xff]
      %v664 = vld [vmem:[%s662 + $0x8] sm:$0xff]
      %v665 = vld [vmem:[%s662 + $0x10] sm:$0xff]
      %667 = vset.pattern.permute.xlu0 0
      %668 = vperm.xlu0 %667, %v663
      %v669 = vpop.permute.xlu0 %668
      %672 = vset.pattern.permute.xlu0 0
      %673 = vperm.xlu0 %672, %v664
      %v674 = vpop.permute.xlu0 %673
      %677 = vset.pattern.permute.xlu0 0
      %678 = vperm.xlu0 %677, %v665
      %v679 = vpop.permute.xlu0 %678
      %v681 = vmul.f32 %v656, %v669
      %v682 = vmul.f32 %v657, %v669
      %v683 = vmul.f32 %v658, %v674
      %v684 = vmul.f32 %v659, %v674
      %v685 = vmul.f32 %v660, %v679
      %v686 = vmul.f32 %v661, %v679
      %v687 = vadd.f32 %v624, %v681
      %v688 = vadd.f32 %v625, %v682
      %v689 = vadd.f32 %v626, %v683
      %v690 = vadd.f32 %v627, %v684
      %v691 = vadd.f32 %v628, %v685
      %v692 = vadd.f32 %v629, %v686
      %693 = vrot.lane.b32.xlu0 %v473, 1
      %v694 = vpop.permute.xlu0 %693
      %695 = vrot.lane.b32.xlu0 %v475, 1
      %v696 = vpop.permute.xlu0 %695
      %697 = vrot.lane.b32.xlu0 %v477, 1
      %v698 = vpop.permute.xlu0 %697
      %699 = vrot.lane.b32.xlu0 %v474, 1
      %v700 = vpop.permute.xlu0 %699
      %701 = vrot.lane.b32.xlu0 %v476, 1
      %v702 = vpop.permute.xlu0 %701
      %703 = vrot.lane.b32.xlu0 %v478, 1
      %v704 = vpop.permute.xlu0 %703
      %vm705 = vcmp.lt.s32.totalorder %v517, 1
      %v706 = vsel %vm705, %v694, %v700
      %v707 = vsel %vm705, %v696, %v702
      %v708 = vsel %vm705, %v698, %v704
      %v709 = vsel %vm705, %v700, %v694
      %v710 = vsel %vm705, %v702, %v696
      %v711 = vsel %vm705, %v704, %v698
      %s712 = scalar_lea.vmem %s5, 6
      %v713 = vld [vmem:[%s712] sm:$0x3]
      %v715 = vperm.slane %v713, 0
      %v716 = vperm.slane %v713, 1
      %v719 = vmul.f32 %v709, %v715
      %v720 = vmul.f32 %v706, %v716
      %v721 = vmul.f32 %v710, %v715
      %v722 = vmul.f32 %v707, %v716
      %v723 = vmul.f32 %v711, %v715
      %v724 = vmul.f32 %v708, %v716
      %s725 = scalar_lea.vmem %s3, 72
      %v726 = vld [vmem:[%s725] sm:$0xff]
      %v727 = vld [vmem:[%s725 + $0x8] sm:$0xff]
      %v728 = vld [vmem:[%s725 + $0x10] sm:$0xff]
      %730 = vset.pattern.permute.xlu0 0
      %731 = vperm.xlu0 %730, %v726
      %v732 = vpop.permute.xlu0 %731
      %735 = vset.pattern.permute.xlu0 0
      %736 = vperm.xlu0 %735, %v727
      %v737 = vpop.permute.xlu0 %736
      %740 = vset.pattern.permute.xlu0 0
      %741 = vperm.xlu0 %740, %v728
      %v742 = vpop.permute.xlu0 %741
      %v744 = vmul.f32 %v719, %v732
      %v745 = vmul.f32 %v720, %v732
      %v746 = vmul.f32 %v721, %v737
      %v747 = vmul.f32 %v722, %v737
      %v748 = vmul.f32 %v723, %v742
      %v749 = vmul.f32 %v724, %v742
      %v750 = vadd.f32 %v687, %v744
      %v751 = vadd.f32 %v688, %v745
      %v752 = vadd.f32 %v689, %v746
      %v753 = vadd.f32 %v690, %v747
      %v754 = vadd.f32 %v691, %v748
      %v755 = vadd.f32 %v692, %v749
      %756 = vrot.lane.b32.xlu0 %v473, 127
      %v757 = vpop.permute.xlu0 %756
      %758 = vrot.lane.b32.xlu0 %v475, 127
      %v759 = vpop.permute.xlu0 %758
      %760 = vrot.lane.b32.xlu0 %v477, 127
      %v761 = vpop.permute.xlu0 %760
      %762 = vrot.lane.b32.xlu0 %v474, 127
      %v763 = vpop.permute.xlu0 %762
      %764 = vrot.lane.b32.xlu0 %v476, 127
      %v765 = vpop.permute.xlu0 %764
      %766 = vrot.lane.b32.xlu0 %v478, 127
      %v767 = vpop.permute.xlu0 %766
      %vm768 = vcmp.lt.s32.totalorder %v517, 127
      %v769 = vsel %vm768, %v757, %v763
      %v770 = vsel %vm768, %v759, %v765
      %v771 = vsel %vm768, %v761, %v767
      %v772 = vsel %vm768, %v763, %v757
      %v773 = vsel %vm768, %v765, %v759
      %v774 = vsel %vm768, %v767, %v761
      %s775 = scalar_lea.vmem %s5, 10
      %v776 = vld [vmem:[%s775] sm:$0x3]
      %v778 = vperm.slane %v776, 0
      %v779 = vperm.slane %v776, 1
      %v782 = vmul.f32 %v769, %v778
      %v783 = vmul.f32 %v772, %v779
      %v784 = vmul.f32 %v770, %v778
      %v785 = vmul.f32 %v773, %v779
      %v786 = vmul.f32 %v771, %v778
      %v787 = vmul.f32 %v774, %v779
      %s788 = scalar_lea.vmem %s3, 120
      %v789 = vld [vmem:[%s788] sm:$0xff]
      %v790 = vld [vmem:[%s788 + $0x8] sm:$0xff]
      %v791 = vld [vmem:[%s788 + $0x10] sm:$0xff]
      %793 = vset.pattern.permute.xlu0 0
      %794 = vperm.xlu0 %793, %v789
      %v795 = vpop.permute.xlu0 %794
      %798 = vset.pattern.permute.xlu0 0
      %799 = vperm.xlu0 %798, %v790
      %v800 = vpop.permute.xlu0 %799
      %803 = vset.pattern.permute.xlu0 0
      %804 = vperm.xlu0 %803, %v791
      %v805 = vpop.permute.xlu0 %804
      %v807 = vmul.f32 %v782, %v795
      %v808 = vmul.f32 %v783, %v795
      %v809 = vmul.f32 %v784, %v800
      %v810 = vmul.f32 %v785, %v800
      %v811 = vmul.f32 %v786, %v805
      %v812 = vmul.f32 %v787, %v805
      %v813 = vadd.f32 %v750, %v807
      %v814 = vadd.f32 %v751, %v808
      %v815 = vadd.f32 %v752, %v809
      %v816 = vadd.f32 %v753, %v810
      %v817 = vadd.f32 %v754, %v811
      %v818 = vadd.f32 %v755, %v812
      %819 = vrot.lane.b32.xlu0 %v473, 113
      %v820 = vpop.permute.xlu0 %819
      %821 = vrot.lane.b32.xlu0 %v475, 113
      %v822 = vpop.permute.xlu0 %821
      %823 = vrot.lane.b32.xlu0 %v477, 113
      %v824 = vpop.permute.xlu0 %823
      %825 = vrot.lane.b32.xlu0 %v474, 113
      %v826 = vpop.permute.xlu0 %825
      %827 = vrot.lane.b32.xlu0 %v476, 113
      %v828 = vpop.permute.xlu0 %827
      %829 = vrot.lane.b32.xlu0 %v478, 113
      %v830 = vpop.permute.xlu0 %829
      %vm831 = vcmp.lt.s32.totalorder %v517, 113
      %v832 = vsel %vm831, %v820, %v826
      %v833 = vsel %vm831, %v822, %v828
      %v834 = vsel %vm831, %v824, %v830
      %v835 = vsel %vm831, %v826, %v820
      %v836 = vsel %vm831, %v828, %v822
      %v837 = vsel %vm831, %v830, %v824
      %s838 = scalar_lea.vmem %s5, 12
      %v839 = vld [vmem:[%s838] sm:$0x3]
      %v841 = vperm.slane %v839, 0
      %v842 = vperm.slane %v839, 1
      %v845 = vmul.f32 %v832, %v841
      %v846 = vmul.f32 %v835, %v842
      %v847 = vmul.f32 %v833, %v841
      %v848 = vmul.f32 %v836, %v842
      %v849 = vmul.f32 %v834, %v841
      %v850 = vmul.f32 %v837, %v842
      %s851 = scalar_lea.vmem %s3, 144
      %v852 = vld [vmem:[%s851] sm:$0xff]
      %v853 = vld [vmem:[%s851 + $0x8] sm:$0xff]
      %v854 = vld [vmem:[%s851 + $0x10] sm:$0xff]
      %856 = vset.pattern.permute.xlu0 0
      %857 = vperm.xlu0 %856, %v852
      %v858 = vpop.permute.xlu0 %857
      %861 = vset.pattern.permute.xlu0 0
      %862 = vperm.xlu0 %861, %v853
      %v863 = vpop.permute.xlu0 %862
      %866 = vset.pattern.permute.xlu0 0
      %867 = vperm.xlu0 %866, %v854
      %v868 = vpop.permute.xlu0 %867
      %v870 = vmul.f32 %v845, %v858
      %v871 = vmul.f32 %v846, %v858
      %v872 = vmul.f32 %v847, %v863
      %v873 = vmul.f32 %v848, %v863
      %v874 = vmul.f32 %v849, %v868
      %v875 = vmul.f32 %v850, %v868
      %v876 = vadd.f32 %v813, %v870
      %v877 = vadd.f32 %v814, %v871
      %v878 = vadd.f32 %v815, %v872
      %v879 = vadd.f32 %v816, %v873
      %v880 = vadd.f32 %v817, %v874
      %v881 = vadd.f32 %v818, %v875
      %882 = vrot.lane.b32.xlu0 %v473, 112
      %v883 = vpop.permute.xlu0 %882
      %884 = vrot.lane.b32.xlu0 %v475, 112
      %v885 = vpop.permute.xlu0 %884
      %886 = vrot.lane.b32.xlu0 %v477, 112
      %v887 = vpop.permute.xlu0 %886
      %888 = vrot.lane.b32.xlu0 %v474, 112
      %v889 = vpop.permute.xlu0 %888
      %890 = vrot.lane.b32.xlu0 %v476, 112
      %v891 = vpop.permute.xlu0 %890
      %892 = vrot.lane.b32.xlu0 %v478, 112
      %v893 = vpop.permute.xlu0 %892
      %vm894 = vcmp.lt.s32.totalorder %v517, 112
      %v895 = vsel %vm894, %v883, %v889
      %v896 = vsel %vm894, %v885, %v891
      %v897 = vsel %vm894, %v887, %v893
      %v898 = vsel %vm894, %v889, %v883
      %v899 = vsel %vm894, %v891, %v885
      %v900 = vsel %vm894, %v893, %v887
      %s901 = scalar_lea.vmem %s5, 14
      %v902 = vld [vmem:[%s901] sm:$0x3]
      %v904 = vperm.slane %v902, 0
      %v905 = vperm.slane %v902, 1
      %v908 = vmul.f32 %v895, %v904
      %v909 = vmul.f32 %v898, %v905
      %v910 = vmul.f32 %v896, %v904
      %v911 = vmul.f32 %v899, %v905
      %v912 = vmul.f32 %v897, %v904
      %v913 = vmul.f32 %v900, %v905
      %s914 = scalar_lea.vmem %s3, 168
      %v915 = vld [vmem:[%s914] sm:$0xff]
      %v916 = vld [vmem:[%s914 + $0x8] sm:$0xff]
      %v917 = vld [vmem:[%s914 + $0x10] sm:$0xff]
      %919 = vset.pattern.permute.xlu0 0
      %920 = vperm.xlu0 %919, %v915
      %v921 = vpop.permute.xlu0 %920
      %924 = vset.pattern.permute.xlu0 0
      %925 = vperm.xlu0 %924, %v916
      %v926 = vpop.permute.xlu0 %925
      %929 = vset.pattern.permute.xlu0 0
      %930 = vperm.xlu0 %929, %v917
      %v931 = vpop.permute.xlu0 %930
      %v933 = vmul.f32 %v908, %v921
      %v934 = vmul.f32 %v909, %v921
      %v935 = vmul.f32 %v910, %v926
      %v936 = vmul.f32 %v911, %v926
      %v937 = vmul.f32 %v912, %v931
      %v938 = vmul.f32 %v913, %v931
      %v939 = vadd.f32 %v876, %v933
      %v940 = vadd.f32 %v877, %v934
      %v941 = vadd.f32 %v878, %v935
      %v942 = vadd.f32 %v879, %v936
      %v943 = vadd.f32 %v880, %v937
      %v944 = vadd.f32 %v881, %v938
      %945 = vrot.lane.b32.xlu0 %v473, 111
      %v946 = vpop.permute.xlu0 %945
      %947 = vrot.lane.b32.xlu0 %v475, 111
      %v948 = vpop.permute.xlu0 %947
      %949 = vrot.lane.b32.xlu0 %v477, 111
      %v950 = vpop.permute.xlu0 %949
      %951 = vrot.lane.b32.xlu0 %v474, 111
      %v952 = vpop.permute.xlu0 %951
      %953 = vrot.lane.b32.xlu0 %v476, 111
      %v954 = vpop.permute.xlu0 %953
      %955 = vrot.lane.b32.xlu0 %v478, 111
      %v956 = vpop.permute.xlu0 %955
      %vm957 = vcmp.lt.s32.totalorder %v517, 111
      %v958 = vsel %vm957, %v946, %v952
      %v959 = vsel %vm957, %v948, %v954
      %v960 = vsel %vm957, %v950, %v956
      %v961 = vsel %vm957, %v952, %v946
      %v962 = vsel %vm957, %v954, %v948
      %v963 = vsel %vm957, %v956, %v950
      %s964 = scalar_lea.vmem %s5, 16
      %v965 = vld [vmem:[%s964] sm:$0x3]
      %v967 = vperm.slane %v965, 0
      %v968 = vperm.slane %v965, 1
      %v971 = vmul.f32 %v958, %v967
      %v972 = vmul.f32 %v961, %v968
      %v973 = vmul.f32 %v959, %v967
      %v974 = vmul.f32 %v962, %v968
      %v975 = vmul.f32 %v960, %v967
      %v976 = vmul.f32 %v963, %v968
      %s977 = scalar_lea.vmem %s3, 192
      %v978 = vld [vmem:[%s977] sm:$0xff]
      %v979 = vld [vmem:[%s977 + $0x8] sm:$0xff]
      %v980 = vld [vmem:[%s977 + $0x10] sm:$0xff]
      %982 = vset.pattern.permute.xlu0 0
      %983 = vperm.xlu0 %982, %v978
      %v984 = vpop.permute.xlu0 %983
      %987 = vset.pattern.permute.xlu0 0
      %988 = vperm.xlu0 %987, %v979
      %v989 = vpop.permute.xlu0 %988
      %992 = vset.pattern.permute.xlu0 0
      %993 = vperm.xlu0 %992, %v980
      %v994 = vpop.permute.xlu0 %993
      %v996 = vmul.f32 %v971, %v984
      %v997 = vmul.f32 %v972, %v984
      %v998 = vmul.f32 %v973, %v989
      %v999 = vmul.f32 %v974, %v989
      %v1000 = vmul.f32 %v975, %v994
      %v1001 = vmul.f32 %v976, %v994
      %v1002 = vadd.f32 %v939, %v996
      %v1003 = vadd.f32 %v940, %v997
      %v1004 = vadd.f32 %v941, %v998
      %v1005 = vadd.f32 %v942, %v999
      %v1006 = vadd.f32 %v943, %v1000
      %v1007 = vadd.f32 %v944, %v1001
      %v1008 = vld [vmem:[%s4] sm:$0xff]
      %v1009 = vld [vmem:[%s4 + $0x8] sm:$0xff]
      %v1010 = vld [vmem:[%s4 + $0x10] sm:$0xff]
      %1012 = vset.pattern.permute.xlu0 0
      %1013 = vperm.xlu0 %1012, %v1008
      %v1014 = vpop.permute.xlu0 %1013
      %1017 = vset.pattern.permute.xlu0 0
      %1018 = vperm.xlu0 %1017, %v1009
      %v1019 = vpop.permute.xlu0 %1018
      %1022 = vset.pattern.permute.xlu0 0
      %1023 = vperm.xlu0 %1022, %v1010
      %v1024 = vpop.permute.xlu0 %1023
      %v1026 = vadd.f32 %v1002, %v1014
      %v1027 = vadd.f32 %v1003, %v1014
      %v1028 = vadd.f32 %v1004, %v1019
      %v1029 = vadd.f32 %v1005, %v1019
      %v1030 = vadd.f32 %v1006, %v1024
      %v1031 = vadd.f32 %v1007, %v1024
      %v1032 = vmax.f32 %v1026, 0.0
      %v1033 = vmax.f32 %v1027, 0.0
      %v1034 = vmax.f32 %v1028, 0.0
      %v1035 = vmax.f32 %v1029, 0.0
      %v1036 = vmax.f32 %v1030, 0.0
      %v1037 = vmax.f32 %v1031, 0.0
      %v1038 = vld [vmem:[%s6] sm:$0xff]
      %v1039 = vld [vmem:[%s6 + $0x8] sm:$0xff]
      %v1040 = vld [vmem:[%s7] sm:$0xff]
      %v1041 = vld [vmem:[%s7 + $0x8] sm:$0xff]
      %1043 = vset.pattern.permute.xlu0 0
      %1044 = vperm.xlu0 %1043, %v1040
      %v1045 = vpop.permute.xlu0 %1044
      %1048 = vset.pattern.permute.xlu0 0
      %1049 = vperm.xlu0 %1048, %v1041
      %v1050 = vpop.permute.xlu0 %1049
      %vm1052 = vcmask 195584
      %v1054 = vsel %vm1052, %v1038, 0
      %v1057 = vsel %vm1052, %v1039, 0
      %1059 = vmatpush.msra.mxu0 0.0
      %1060 = vmatpush.msra.mxu0 0.0
      %1061 = vmatpush.msra.mxu0 0.0
      %1062 = vmatpush.msra.mxu0 0.0
      %1063 = vmatpush.msra.mxu0 0.0
      %1064 = vmatpush.msra.mxu0 0.0
      %1065 = vmatpush.msra.mxu0 0.0
      %1066 = vmatpush.msra.mxu0 0.0
      %1067 = vmatpush.msra.mxu0 0.0
      %1068 = vmatpush.msra.mxu0 0.0
      %1069 = vmatpush.msra.mxu0 0.0
      %1070 = vmatpush.msra.mxu0 0.0
      %1071 = vmatpush.msra.mxu0 0.0
      %1072 = vmatpush.msra.mxu0 %v1036
      %1073 = vmatpush.msra.mxu0 %v1034
      %1074 = vmatpush.msra.mxu0 %v1032
      %1075 = vmatmul.f32.gmra.mxu0 %v1054
      %v1076 = vpop.f32.mrf.mxu0
      %v1077 = vadd.f32 %v1045, %v1076
      %1078 = vmatmul.f32.gmra.mxu0 %v1057
      %v1079 = vpop.f32.mrf.mxu0
      %v1080 = vadd.f32 %v1050, %v1079
      %1081 = vdwg.mxu0
      %1082 = vmatpush.msra.mxu0 0.0
      %1083 = vmatpush.msra.mxu0 0.0
      %1084 = vmatpush.msra.mxu0 0.0
      %1085 = vmatpush.msra.mxu0 0.0
      %1086 = vmatpush.msra.mxu0 0.0
      %1087 = vmatpush.msra.mxu0 0.0
      %1088 = vmatpush.msra.mxu0 0.0
      %1089 = vmatpush.msra.mxu0 0.0
      %1090 = vmatpush.msra.mxu0 0.0
      %1091 = vmatpush.msra.mxu0 0.0
      %1092 = vmatpush.msra.mxu0 0.0
      %1093 = vmatpush.msra.mxu0 0.0
      %1094 = vmatpush.msra.mxu0 0.0
      %1095 = vmatpush.msra.mxu0 %v1037
      %1096 = vmatpush.msra.mxu0 %v1035
      %1097 = vmatpush.msra.mxu0 %v1033
      %1098 = vmatmul.f32.gmra.mxu0 %v1054
      %v1099 = vpop.f32.mrf.mxu0
      %v1100 = vadd.f32 %v1045, %v1099
      %1101 = vmatmul.f32.gmra.mxu0 %v1057
      %v1102 = vpop.f32.mrf.mxu0
      %v1103 = vadd.f32 %v1050, %v1102
      %1104 = vdwg.mxu0
      %v1105 = vmax.f32 %v1077, 0.0
      %v1106 = vmax.f32 %v1100, 0.0
      %v1107 = vmax.f32 %v1080, 0.0
      %v1108 = vmax.f32 %v1103, 0.0
      %v1109 = vpack.c.bf16 %v1106, %v1105
      %v1110 = vpack.c.bf16 %v1108, %v1107
      %1111 = vst [vmem:[%s305] sm:$0xff] %v1109
      %1112 = vst [vmem:[%s305 + $0x8] sm:$0xff] %v1110
      %p1113 = scmp.lt.s32.totalorder %s19, 1
      %s1114 = scalar_select %p1113, %s19, 1
      %s1115 = smul.addr %s1114, 4
      %s1116 = smul.addr %s1115, 4
      %s1117 = scalar_lea.vmem %s8, %s1116
      // Predicated region
      $region53: #{spnas_final_block.1} parent=51 // pred_check
        %p1118 = pneg %p210
      $region54: #{spnas_final_block.1} parent=51 // pred_check_branch
        %1120 = sbr.rel (%p1118) target = $region56
      $region55: #{spnas_final_block.1} parent=51 // pred_region
        _
      $region56: #{spnas_final_block.1} parent=51 // pred_fallthru
        _
    $region52: #{spnas_final_block.1} parent=5 // pred_fallthru
      _
    %p1121 = scmp.le.s32.totalorder 2, %s14
    // Predicated region
    $region57: #{spnas_final_block.1} parent=5 // pred_check
      %p1122 = pneg %p1121
    $region58: #{spnas_final_block.1} parent=5 // pred_check_branch
      %1124 = sbr.rel (%p1122) target = $region60
    $region59: #{spnas_final_block.1} parent=5 // pred_region
      %s1125 = ssub.s32 %s14, 2
      // Predicated region
      $region61: #{spnas_final_block.1} parent=59 // pred_check
        %p1126 = pneg %p216
      $region62: #{spnas_final_block.1} parent=59 // pred_check_branch
        %1128 = sbr.rel (%p1126) target = $region64
      $region63: #{spnas_final_block.1} parent=59 // pred_region
        %p1129 = scmp.lt.s32.totalorder %s20, 1
        %s1130 = scalar_select %p1129, %s20, 1
        %s1131 = smul.addr %s1130, 4
        %s1132 = smul.addr %s1131, 4
        %s1133 = scalar_lea.vmem %s8, %s1132
      $region64: #{spnas_final_block.1} parent=59 // pred_fallthru
        _
    $region60: #{spnas_final_block.1} parent=5 // pred_fallthru
      _
  $region6: #{spnas_final_block.1} parent=0 // loop_footer
    %s18 = sadd.s32 1, %s14
  $region7: #{spnas_final_block.1} parent=0 // loop_footer_branch
    %13 = sbr.rel target = $region3
  $region8: #{spnas_final_block.1} parent=0 // loop_exit
    _

</llo_original>
